<compile_context>
chip_gen: v7x
topology: tpu7x:2x2x1
jax: 0.10.0
libtpu: 0.0.40
codegen_flags: <defaults>
</compile_context>

<pallas_src>
import functools

import jax
import jax.numpy as jnp
from jax.experimental import pallas as pl
from jax.experimental.pallas import tpu as pltpu

NUM_OF_FRAMES = 4
N_ACTIONS = 6
IN_FEATURES = NUM_OF_FRAMES * 6   # 24
OUT_PAD = 128                     # lane-dense padded output width
DEFAULT_TB = 1024                 # max batch-tile rows
TILE_ALIGN = 16                   # 16-row tiles (bf16 sublane packing; >= 8)


def _cdiv(a, b):
    return -(-a // b)


def _round_up(n, m):
    return _cdiv(n, m) * m


def _choose_tile(batch, tb_max):
    """Adaptive batch tile: minimize batch padding, guarantee >= 2 grid steps
    for v7x megacore when the batch is large enough, 16-row aligned."""
    batch = max(1, int(batch))
    tb_max = _round_up(max(TILE_ALIGN, int(tb_max)), TILE_ALIGN)
    n_tiles = _cdiv(batch, tb_max)
    if n_tiles < 2 and batch >= 2 * TILE_ALIGN:
        n_tiles = 2                         # feed both TensorCores on v7x
    tb = _round_up(_cdiv(batch, n_tiles), TILE_ALIGN)
    return max(TILE_ALIGN, min(tb, tb_max))


def mlp_kernel(x_ref,
               w1_ref, b1_ref,
               w2_ref, b2_ref,
               w3_ref, b3_ref,
               w4_ref, b4_ref,
               w5_ref, b5_ref,
               o_ref):
    # Fused 5-layer MLP on one batch tile: bf16 matmuls on the MXU with f32
    # accumulation, bias-add + ReLU on the VPU, all operands resident in VMEM.
    h = x_ref[...].astype(jnp.bfloat16)

    h = jnp.dot(h, w1_ref[...], preferred_element_type=jnp.float32) + b1_ref[...]
    h = jnp.maximum(h, 0.0).astype(jnp.bfloat16)

    h = jnp.dot(h, w2_ref[...], preferred_element_type=jnp.float32) + b2_ref[...]
    h = jnp.maximum(h, 0.0).astype(jnp.bfloat16)

    h = jnp.dot(h, w3_ref[...], preferred_element_type=jnp.float32) + b3_ref[...]
    h = jnp.maximum(h, 0.0).astype(jnp.bfloat16)

    h = jnp.dot(h, w4_ref[...], preferred_element_type=jnp.float32) + b4_ref[...]
    h = jnp.maximum(h, 0.0).astype(jnp.bfloat16)

    h = jnp.dot(h, w5_ref[...], preferred_element_type=jnp.float32) + b5_ref[...]

    o_ref[...] = h.astype(o_ref.dtype)      # bf16 lane-dense writeback


def _x_map(i):
    return (i, 0)


def _resident_map(i):
    # Weights/biases: same block every grid step -> stays resident in VMEM.
    return (0, 0)


def prepare_params(params):
    """One-time prep: pad the final layer to a lane-dense 128-wide output."""
    (w1, b1), (w2, b2), (w3, b3), (w4, b4), (w5, b5) = params
    w5p = jnp.zeros((w5.shape[0], OUT_PAD), w5.dtype).at[:, :N_ACTIONS].set(w5)
    b5p = jnp.zeros((1, OUT_PAD), b5.dtype).at[:, :N_ACTIONS].set(b5)
    return ((w1, b1), (w2, b2), (w3, b3), (w4, b4), (w5p, b5p))


@functools.partial(jax.jit, static_argnames=("tb_max",))
def mlp_forward(x, padded_params, *, tb_max=DEFAULT_TB):
    """x: (B, NUM_OF_FRAMES, 6) -> (B, N_ACTIONS) float32."""
    B = x.shape[0]
    x_flat = x.reshape(B, IN_FEATURES)      # keep caller dtype; cast in kernel

    (w1, b1), (w2, b2), (w3, b3), (w4, b4), (w5p, b5p) = padded_params

    tb = _choose_tile(B, tb_max)
    b_pad = _round_up(B, tb)
    if b_pad != B:
        x_flat = jnp.pad(x_flat, ((0, b_pad - B), (0, 0)))
    grid = (b_pad // tb,)

    in_specs = [
        pl.BlockSpec((tb, IN_FEATURES), _x_map),
        pl.BlockSpec(w1.shape, _resident_map), pl.BlockSpec(b1.shape, _resident_map),
        pl.BlockSpec(w2.shape, _resident_map), pl.BlockSpec(b2.shape, _resident_map),
        pl.BlockSpec(w3.shape, _resident_map), pl.BlockSpec(b3.shape, _resident_map),
        pl.BlockSpec(w4.shape, _resident_map), pl.BlockSpec(b4.shape, _resident_map),
        pl.BlockSpec(w5p.shape, _resident_map), pl.BlockSpec(b5p.shape, _resident_map),
    ]

    out = pl.pallas_call(
        mlp_kernel,
        out_shape=jax.ShapeDtypeStruct((b_pad, OUT_PAD), jnp.bfloat16),
        grid=grid,
        in_specs=in_specs,
        out_specs=pl.BlockSpec((tb, OUT_PAD), _x_map),
        compiler_params=pltpu.CompilerParams(
            dimension_semantics=("parallel",),
        ),
    )(x_flat, w1, b1, w2, b2, w3, b3, w4, b4, w5p, b5p)

    return out[:B, :N_ACTIONS].astype(jnp.float32)


def init_linear(key, fan_in, fan_out):
    # PyTorch nn.Linear default init: U(-1/sqrt(fan_in), 1/sqrt(fan_in)).
    # Weights stored bf16 (MXU low-precision path), biases stay f32.
    kw, kb = jax.random.split(key)
    bound = 1.0 / (fan_in ** 0.5)
    w = jax.random.uniform(kw, (fan_in, fan_out), jnp.float32, -bound, bound)
    b = jax.random.uniform(kb, (1, fan_out), jnp.float32, -bound, bound)
    return w.astype(jnp.bfloat16), b


def init_params(key):
    dims = [(IN_FEATURES, 64), (64, 256), (256, 256), (256, 64), (64, N_ACTIONS)]
    keys = jax.random.split(key, len(dims))
    return [init_linear(k, fi, fo) for k, (fi, fo) in zip(keys, dims)]


def reference_forward(x, params):
    # Pure-JAX reference (f32 matmuls on the same bf16 weights).
    B = x.shape[0]
    h = x.reshape(B, IN_FEATURES).astype(jnp.float32)
    for i, (w, b) in enumerate(params):
        h = h @ w.astype(jnp.float32) + b
        if i < len(params) - 1:
            h = jnp.maximum(h, 0.0)
    return h


if __name__ == "__main__":
    key = jax.random.PRNGKey(0)
    k_x, k_p, k_x2 = jax.random.split(key, 3)

    params = init_params(k_p)
    padded_params = prepare_params(params)   # one-time lane-pad of fc5

    # Small case (typical online DQN inference shape).
    batch = 2
    x = jax.random.normal(k_x, (batch, NUM_OF_FRAMES, 6), jnp.float32)
    out = jax.block_until_ready(mlp_forward(x, padded_params))
    ref = reference_forward(x, params)
    assert out.shape == (batch, N_ACTIONS)
    assert jnp.allclose(out, ref, atol=5e-2, rtol=5e-2), "small-batch mismatch"

    # Larger, non-multiple-of-tile batch: adaptive tiles + multi-step grid.
    batch2 = 700
    x2 = jax.random.normal(k_x2, (batch2, NUM_OF_FRAMES, 6), jnp.float32)
    out2 = jax.block_until_ready(mlp_forward(x2, padded_params, tb_max=256))
    ref2 = reference_forward(x2, params)
    assert out2.shape == (batch2, N_ACTIONS)
    assert jnp.allclose(out2, ref2, atol=5e-2, rtol=5e-2), "tiled-batch mismatch"

    # Default (large) tile path: 2 grid steps at tb=352 for B=700.
    out3 = jax.block_until_ready(mlp_forward(x2, padded_params))
    assert jnp.allclose(out3, ref2, atol=5e-2, rtol=5e-2), "default-tile mismatch"

    print("KERNEL_OK")
</pallas_src>

<mosaic_0001>
module attributes {stable_mosaic.version = 11 : i64} {
  func.func @mlp_kernel(%arg0: i32, %arg1: memref<16x24xf32, #tpu.memory_space<vmem>>, %arg2: memref<24x64xbf16, #tpu.memory_space<vmem>>, %arg3: memref<1x64xf32, #tpu.memory_space<vmem>>, %arg4: memref<64x256xbf16, #tpu.memory_space<vmem>>, %arg5: memref<1x256xf32, #tpu.memory_space<vmem>>, %arg6: memref<256x256xbf16, #tpu.memory_space<vmem>>, %arg7: memref<1x256xf32, #tpu.memory_space<vmem>>, %arg8: memref<256x64xbf16, #tpu.memory_space<vmem>>, %arg9: memref<1x64xf32, #tpu.memory_space<vmem>>, %arg10: memref<64x128xbf16, #tpu.memory_space<vmem>>, %arg11: memref<1x128xf32, #tpu.memory_space<vmem>>, %arg12: memref<16x128xbf16, #tpu.memory_space<vmem>>) attributes {dimension_semantics = [#tpu.dimension_semantics<parallel>], iteration_bounds = array<i64: 1>, scalar_prefetch = 0 : i64, scratch_operands = 0 : i64, tpu.core_type = #tpu.core_type<tc>, window_params = [{transform_indices = @transform_0, window_bounds = array<i64: 16, 24>}, {pipeline_mode = #tpu.pipeline_mode<synchronous>, transform_indices = @transform_1, window_bounds = array<i64: 24, 64>}, {pipeline_mode = #tpu.pipeline_mode<synchronous>, transform_indices = @transform_2, window_bounds = array<i64: 1, 64>}, {pipeline_mode = #tpu.pipeline_mode<synchronous>, transform_indices = @transform_3, window_bounds = array<i64: 64, 256>}, {pipeline_mode = #tpu.pipeline_mode<synchronous>, transform_indices = @transform_4, window_bounds = array<i64: 1, 256>}, {pipeline_mode = #tpu.pipeline_mode<synchronous>, transform_indices = @transform_5, window_bounds = array<i64: 256, 256>}, {pipeline_mode = #tpu.pipeline_mode<synchronous>, transform_indices = @transform_6, window_bounds = array<i64: 1, 256>}, {pipeline_mode = #tpu.pipeline_mode<synchronous>, transform_indices = @transform_7, window_bounds = array<i64: 256, 64>}, {pipeline_mode = #tpu.pipeline_mode<synchronous>, transform_indices = @transform_8, window_bounds = array<i64: 1, 64>}, {pipeline_mode = #tpu.pipeline_mode<synchronous>, transform_indices = @transform_9, window_bounds = array<i64: 64, 128>}, {pipeline_mode = #tpu.pipeline_mode<synchronous>, transform_indices = @transform_10, window_bounds = array<i64: 1, 128>}, {transform_indices = @transform_11, window_bounds = array<i64: 16, 128>}]} {
    %c0 = arith.constant 0 : index
    %c0_0 = arith.constant 0 : index
    %0 = vector.load %arg1[%c0, %c0_0] : memref<16x24xf32, #tpu.memory_space<vmem>>, vector<16x24xf32>
    %1 = arith.truncf %0 : vector<16x24xf32> to vector<16x24xbf16>
    %c0_1 = arith.constant 0 : index
    %c0_2 = arith.constant 0 : index
    %2 = vector.load %arg2[%c0_1, %c0_2] : memref<24x64xbf16, #tpu.memory_space<vmem>>, vector<24x64xbf16>
    %cst = arith.constant dense<0.000000e+00> : vector<16x64xf32>
    %3 = tpu.matmul %1, %2, %cst {dimension_numbers = #tpu.dot_dimension_numbers<[1], [0], [0], [1], [0, 0, 1, 1], [], []>} : vector<16x24xbf16>, vector<24x64xbf16>, vector<16x64xf32> -> vector<16x64xf32>
    %c0_3 = arith.constant 0 : index
    %c0_4 = arith.constant 0 : index
    %4 = vector.load %arg3[%c0_3, %c0_4] : memref<1x64xf32, #tpu.memory_space<vmem>>, vector<1x64xf32>
    %5 = vector.broadcast %4 : vector<1x64xf32> to vector<16x64xf32>
    %6 = arith.addf %3, %5 : vector<16x64xf32>
    %cst_5 = arith.constant 0.000000e+00 : f32
    %7 = vector.broadcast %cst_5 : f32 to vector<16x64xf32>
    %8 = arith.maximumf %6, %7 : vector<16x64xf32>
    %9 = arith.truncf %8 : vector<16x64xf32> to vector<16x64xbf16>
    %c0_6 = arith.constant 0 : index
    %c0_7 = arith.constant 0 : index
    %10 = vector.load %arg4[%c0_6, %c0_7] : memref<64x256xbf16, #tpu.memory_space<vmem>>, vector<64x256xbf16>
    %cst_8 = arith.constant dense<0.000000e+00> : vector<16x256xf32>
    %11 = tpu.matmul %9, %10, %cst_8 {dimension_numbers = #tpu.dot_dimension_numbers<[1], [0], [0], [1], [0, 0, 1, 1], [], []>} : vector<16x64xbf16>, vector<64x256xbf16>, vector<16x256xf32> -> vector<16x256xf32>
    %c0_9 = arith.constant 0 : index
    %c0_10 = arith.constant 0 : index
    %12 = vector.load %arg5[%c0_9, %c0_10] : memref<1x256xf32, #tpu.memory_space<vmem>>, vector<1x256xf32>
    %13 = vector.broadcast %12 : vector<1x256xf32> to vector<16x256xf32>
    %14 = arith.addf %11, %13 : vector<16x256xf32>
    %cst_11 = arith.constant 0.000000e+00 : f32
    %15 = vector.broadcast %cst_11 : f32 to vector<16x256xf32>
    %16 = arith.maximumf %14, %15 : vector<16x256xf32>
    %17 = arith.truncf %16 : vector<16x256xf32> to vector<16x256xbf16>
    %c0_12 = arith.constant 0 : index
    %c0_13 = arith.constant 0 : index
    %18 = vector.load %arg6[%c0_12, %c0_13] : memref<256x256xbf16, #tpu.memory_space<vmem>>, vector<256x256xbf16>
    %cst_14 = arith.constant dense<0.000000e+00> : vector<16x256xf32>
    %19 = tpu.matmul %17, %18, %cst_14 {dimension_numbers = #tpu.dot_dimension_numbers<[1], [0], [0], [1], [0, 0, 1, 1], [], []>} : vector<16x256xbf16>, vector<256x256xbf16>, vector<16x256xf32> -> vector<16x256xf32>
    %c0_15 = arith.constant 0 : index
    %c0_16 = arith.constant 0 : index
    %20 = vector.load %arg7[%c0_15, %c0_16] : memref<1x256xf32, #tpu.memory_space<vmem>>, vector<1x256xf32>
    %21 = vector.broadcast %20 : vector<1x256xf32> to vector<16x256xf32>
    %22 = arith.addf %19, %21 : vector<16x256xf32>
    %cst_17 = arith.constant 0.000000e+00 : f32
    %23 = vector.broadcast %cst_17 : f32 to vector<16x256xf32>
    %24 = arith.maximumf %22, %23 : vector<16x256xf32>
    %25 = arith.truncf %24 : vector<16x256xf32> to vector<16x256xbf16>
    %c0_18 = arith.constant 0 : index
    %c0_19 = arith.constant 0 : index
    %26 = vector.load %arg8[%c0_18, %c0_19] : memref<256x64xbf16, #tpu.memory_space<vmem>>, vector<256x64xbf16>
    %cst_20 = arith.constant dense<0.000000e+00> : vector<16x64xf32>
    %27 = tpu.matmul %25, %26, %cst_20 {dimension_numbers = #tpu.dot_dimension_numbers<[1], [0], [0], [1], [0, 0, 1, 1], [], []>} : vector<16x256xbf16>, vector<256x64xbf16>, vector<16x64xf32> -> vector<16x64xf32>
    %c0_21 = arith.constant 0 : index
    %c0_22 = arith.constant 0 : index
    %28 = vector.load %arg9[%c0_21, %c0_22] : memref<1x64xf32, #tpu.memory_space<vmem>>, vector<1x64xf32>
    %29 = vector.broadcast %28 : vector<1x64xf32> to vector<16x64xf32>
    %30 = arith.addf %27, %29 : vector<16x64xf32>
    %cst_23 = arith.constant 0.000000e+00 : f32
    %31 = vector.broadcast %cst_23 : f32 to vector<16x64xf32>
    %32 = arith.maximumf %30, %31 : vector<16x64xf32>
    %33 = arith.truncf %32 : vector<16x64xf32> to vector<16x64xbf16>
    %c0_24 = arith.constant 0 : index
    %c0_25 = arith.constant 0 : index
    %34 = vector.load %arg10[%c0_24, %c0_25] : memref<64x128xbf16, #tpu.memory_space<vmem>>, vector<64x128xbf16>
    %cst_26 = arith.constant dense<0.000000e+00> : vector<16x128xf32>
    %35 = tpu.matmul %33, %34, %cst_26 {dimension_numbers = #tpu.dot_dimension_numbers<[1], [0], [0], [1], [0, 0, 1, 1], [], []>} : vector<16x64xbf16>, vector<64x128xbf16>, vector<16x128xf32> -> vector<16x128xf32>
    %c0_27 = arith.constant 0 : index
    %c0_28 = arith.constant 0 : index
    %36 = vector.load %arg11[%c0_27, %c0_28] : memref<1x128xf32, #tpu.memory_space<vmem>>, vector<1x128xf32>
    %37 = vector.broadcast %36 : vector<1x128xf32> to vector<16x128xf32>
    %38 = arith.addf %35, %37 : vector<16x128xf32>
    %39 = arith.truncf %38 : vector<16x128xf32> to vector<16x128xbf16>
    %c0_29 = arith.constant 0 : index
    %c0_30 = arith.constant 0 : index
    %40 = vector.load %arg12[%c0_29, %c0_30] : memref<16x128xbf16, #tpu.memory_space<vmem>>, vector<16x128xbf16>
    tpu.vector_store %arg12[%c0_29, %c0_30], %39 {strides = array<i32>} : memref<16x128xbf16, #tpu.memory_space<vmem>>, vector<16x128xbf16>,
    return
  }
  func.func @transform_0(%arg0: i32) -> (i32, i32) {
    %c0_i32 = arith.constant 0 : i32
    %c0_i32_0 = arith.constant 0 : i32
    return %arg0, %c0_i32 : i32, i32
  }
  func.func @transform_1(%arg0: i32) -> (i32, i32) {
    %c0_i32 = arith.constant 0 : i32
    %c0_i32_0 = arith.constant 0 : i32
    %c0_i32_1 = arith.constant 0 : i32
    return %c0_i32, %c0_i32_0 : i32, i32
  }
  func.func @transform_2(%arg0: i32) -> (i32, i32) {
    %c0_i32 = arith.constant 0 : i32
    %c0_i32_0 = arith.constant 0 : i32
    %c0_i32_1 = arith.constant 0 : i32
    return %c0_i32, %c0_i32_0 : i32, i32
  }
  func.func @transform_3(%arg0: i32) -> (i32, i32) {
    %c0_i32 = arith.constant 0 : i32
    %c0_i32_0 = arith.constant 0 : i32
    %c0_i32_1 = arith.constant 0 : i32
    return %c0_i32, %c0_i32_0 : i32, i32
  }
  func.func @transform_4(%arg0: i32) -> (i32, i32) {
    %c0_i32 = arith.constant 0 : i32
    %c0_i32_0 = arith.constant 0 : i32
    %c0_i32_1 = arith.constant 0 : i32
    return %c0_i32, %c0_i32_0 : i32, i32
  }
  func.func @transform_5(%arg0: i32) -> (i32, i32) {
    %c0_i32 = arith.constant 0 : i32
    %c0_i32_0 = arith.constant 0 : i32
    %c0_i32_1 = arith.constant 0 : i32
    return %c0_i32, %c0_i32_0 : i32, i32
  }
  func.func @transform_6(%arg0: i32) -> (i32, i32) {
    %c0_i32 = arith.constant 0 : i32
    %c0_i32_0 = arith.constant 0 : i32
    %c0_i32_1 = arith.constant 0 : i32
    return %c0_i32, %c0_i32_0 : i32, i32
  }
  func.func @transform_7(%arg0: i32) -> (i32, i32) {
    %c0_i32 = arith.constant 0 : i32
    %c0_i32_0 = arith.constant 0 : i32
    %c0_i32_1 = arith.constant 0 : i32
    return %c0_i32, %c0_i32_0 : i32, i32
  }
  func.func @transform_8(%arg0: i32) -> (i32, i32) {
    %c0_i32 = arith.constant 0 : i32
    %c0_i32_0 = arith.constant 0 : i32
    %c0_i32_1 = arith.constant 0 : i32
    return %c0_i32, %c0_i32_0 : i32, i32
  }
  func.func @transform_9(%arg0: i32) -> (i32, i32) {
    %c0_i32 = arith.constant 0 : i32
    %c0_i32_0 = arith.constant 0 : i32
    %c0_i32_1 = arith.constant 0 : i32
    return %c0_i32, %c0_i32_0 : i32, i32
  }
  func.func @transform_10(%arg0: i32) -> (i32, i32) {
    %c0_i32 = arith.constant 0 : i32
    %c0_i32_0 = arith.constant 0 : i32
    %c0_i32_1 = arith.constant 0 : i32
    return %c0_i32, %c0_i32_0 : i32, i32
  }
  func.func @transform_11(%arg0: i32) -> (i32, i32) {
    %c0_i32 = arith.constant 0 : i32
    %c0_i32_0 = arith.constant 0 : i32
    return %arg0, %c0_i32 : i32, i32
  }
}

</mosaic_0001>

<llo_original>
// kernel: mlp_forward.1
$region0: #{mlp_forward.1}
  #allocation0 [shape = 'u32[]', space=smem, size = 0x4, offset = 0x4, fixed_abs, tag = 'smem constant byte address 0x4 - core index']
  #allocation1 [shape = 'u32[144,128]{1,0:T(1,128)}', space=vmem, size = 0x12000, scoped, tag = 'internal scratch']
  %s0 = inlined_call_operand.vmem [shape: f32[16,24], index: 0, kind: input, shape index: {}]
  %s1 = inlined_call_operand.vmem [shape: bf16[24,64], index: 1, kind: input, shape index: {}]
  %s2 = inlined_call_operand.vmem [shape: f32[1,64], index: 2, kind: input, shape index: {}]
  %s3 = inlined_call_operand.vmem [shape: bf16[64,256], index: 3, kind: input, shape index: {}]
  %s4 = inlined_call_operand.vmem [shape: f32[1,256], index: 4, kind: input, shape index: {}]
  %s5 = inlined_call_operand.hbm [shape: bf16[256,256], index: 5, kind: input, shape index: {}]
  %s6 = inlined_call_operand.vmem [shape: f32[1,256], index: 6, kind: input, shape index: {}]
  %s7 = inlined_call_operand.vmem [shape: bf16[256,64], index: 7, kind: input, shape index: {}]
  %s8 = inlined_call_operand.vmem [shape: f32[1,64], index: 8, kind: input, shape index: {}]
  %s9 = inlined_call_operand.vmem [shape: bf16[64,128], index: 9, kind: input, shape index: {}]
  %s10 = inlined_call_operand.vmem [shape: f32[1,128], index: 10, kind: input, shape index: {}]
  %s11 = inlined_call_operand.vmem [shape: bf16[16,128], index: 11, kind: output, shape index: {}]
  %s12 = sld [smem:[#allocation0]]
  $region58: #{mlp_forward.1} parent=0
    _
  %s14 = ssub.s32 1, %s12
  %s15 = scalar_select 0, %s14, %s12
  $region1: #{mlp_forward.1} parent=0
    #allocation2 [shape = 'u8[131072]{0}', space=vmem, size = 0x20000, scoped, tag = 'input window, operand 5, single buffered']
    #allocation3 [shape = 's32[1]{0}', space=sflag, size = 0x4, scoped, tag = 'scoped memory for mlp_forward.1']
    %16 = vsyncpa [#allocation3], 0
    // Predicated region
    $region2: #{mlp_forward.1} parent=1 // pred_check
      _
    $region3: #{mlp_forward.1} parent=1 // pred_check_branch
      %18 = sbr.rel (0) target = $region5
    $region4: #{mlp_forward.1} parent=1 // pred_region
      _
    $region5: #{mlp_forward.1} parent=1 // pred_fallthru
      _
    // Predicated region
    $region6: #{mlp_forward.1} parent=1 // pred_check
      _
    $region7: #{mlp_forward.1} parent=1 // pred_check_branch
      %20 = sbr.rel (0) target = $region9
    $region8: #{mlp_forward.1} parent=1 // pred_region
      _
    $region9: #{mlp_forward.1} parent=1 // pred_fallthru
      _
    // Predicated region
    $region10: #{mlp_forward.1} parent=1 // pred_check
      _
    $region11: #{mlp_forward.1} parent=1 // pred_check_branch
      %22 = sbr.rel (0) target = $region13
    $region12: #{mlp_forward.1} parent=1 // pred_region
      _
    $region13: #{mlp_forward.1} parent=1 // pred_fallthru
      _
    // Predicated region
    $region14: #{mlp_forward.1} parent=1 // pred_check
      _
    $region15: #{mlp_forward.1} parent=1 // pred_check_branch
      %24 = sbr.rel (0) target = $region17
    $region16: #{mlp_forward.1} parent=1 // pred_region
      _
    $region17: #{mlp_forward.1} parent=1 // pred_fallthru
      _
    // Predicated region
    $region18: #{mlp_forward.1} parent=1 // pred_check
      _
    $region19: #{mlp_forward.1} parent=1 // pred_check_branch
      %26 = sbr.rel (0) target = $region21
    $region20: #{mlp_forward.1} parent=1 // pred_region
      _
    $region21: #{mlp_forward.1} parent=1 // pred_fallthru
      _
    // Predicated region
    $region22: #{mlp_forward.1} parent=1 // pred_check
      _
    $region23: #{mlp_forward.1} parent=1 // pred_check_branch
      %28 = sbr.rel (0) target = $region25
    $region24: #{mlp_forward.1} parent=1 // pred_region
      %s30 = ssub.s32 4096, 4096
      %31 = vsyncadd [#allocation3], %s30
      %s32 = sshll.u32 [#allocation2], 4
      %s33 = int_to_ptr.vmem [resolvable:$true] %s32
      %38 = dma.hbm_to_vmem [thread:$0]  %s5, 4096, %s33, [#allocation3], 128, 128, 8
    $region25: #{mlp_forward.1} parent=1 // pred_fallthru
      _
    // Predicated region
    $region26: #{mlp_forward.1} parent=1 // pred_check
      _
    $region27: #{mlp_forward.1} parent=1 // pred_check_branch
      %40 = sbr.rel (0) target = $region29
    $region28: #{mlp_forward.1} parent=1 // pred_region
      _
    $region29: #{mlp_forward.1} parent=1 // pred_fallthru
      _
    // Predicated region
    $region30: #{mlp_forward.1} parent=1 // pred_check
      _
    $region31: #{mlp_forward.1} parent=1 // pred_check_branch
      %42 = sbr.rel (0) target = $region33
    $region32: #{mlp_forward.1} parent=1 // pred_region
      _
    $region33: #{mlp_forward.1} parent=1 // pred_fallthru
      _
    // Predicated region
    $region34: #{mlp_forward.1} parent=1 // pred_check
      _
    $region35: #{mlp_forward.1} parent=1 // pred_check_branch
      %44 = sbr.rel (0) target = $region37
    $region36: #{mlp_forward.1} parent=1 // pred_region
      _
    $region37: #{mlp_forward.1} parent=1 // pred_fallthru
      _
    // Predicated region
    $region38: #{mlp_forward.1} parent=1 // pred_check
      _
    $region39: #{mlp_forward.1} parent=1 // pred_check_branch
      %46 = sbr.rel (0) target = $region41
    $region40: #{mlp_forward.1} parent=1 // pred_region
      _
    $region41: #{mlp_forward.1} parent=1 // pred_fallthru
      _
    // Predicated region
    $region42: #{mlp_forward.1} parent=1 // pred_check
      _
    $region43: #{mlp_forward.1} parent=1 // pred_check_branch
      %48 = sbr.rel (0) target = $region45
    $region44: #{mlp_forward.1} parent=1 // pred_region
      _
    $region45: #{mlp_forward.1} parent=1 // pred_fallthru
      _
    // Predicated region
    $region46: #{mlp_forward.1} parent=1 // pred_check
      _
    $region47: #{mlp_forward.1} parent=1 // pred_check_branch
      %50 = sbr.rel (0) target = $region49
    $region48: #{mlp_forward.1} parent=1 // pred_region
      %51 = dma.done [#allocation3], 4096
    $region49: #{mlp_forward.1} parent=1 // pred_fallthru
      _
    %v53 = vld [vmem:[%s0] sm:$0xff]
    %v54 = vld [vmem:[%s0 + $0x8] sm:$0xff]
    %v55 = vpack.c.bf16 %v54, %v53
    %v56 = vld [vmem:[%s1] sm:$0xf]
    %v57 = vld [vmem:[%s1 + $0x4] sm:$0xf]
    %v58 = vld [vmem:[%s1 + $0x8] sm:$0xf]
    %v59 = vld [vmem:[%s2] sm:$0x1]
    %v61 = vlaneseq
    %v62 = vshrl.u32 %v61, 7
    %v63 = vsub.s32 0, %v62
    %v64 = vrot.slane %v59, %v63
    %v69 = vunpack.c.l.b16 %v56
    %v70 = vunpack.c.l.b16 %v57
    %v71 = vunpack.c.l.b16 %v58
    %v72 = vpack.c.b16 %v70, %v69
    %v73 = vpack.c.b16 %v71, %v71
    %vm75 = vcmask 195584
    %v77 = vsel %vm75, %v55, 0
    %vm79 = vcmask 1043456
    %v81 = vsel %vm79, %v73, 0
    %83 = vmatprep.subr.bf16.mxu0 0
    %84 = vmatpush1.bf16.msra.mxu0 %v72
    %85 = vmatprep.subr.bf16.mxu0 0
    %86 = vmatpush1.bf16.msra.mxu0 %v81
    %87 = vmatprep.subr.bf16.mxu0 0
    %88 = vmatpush1.bf16.msra.mxu0 0
    %89 = vmatprep.subr.bf16.mxu0 0
    %90 = vmatpush1.bf16.msra.mxu0 0
    %91 = vmatprep.subr.bf16.mxu0 0
    %92 = vmatpush1.bf16.msra.mxu0 0
    %93 = vmatprep.subr.bf16.mxu0 0
    %94 = vmatpush1.bf16.msra.mxu0 0
    %95 = vmatprep.subr.bf16.mxu0 0
    %96 = vmatpush1.bf16.msra.mxu0 0
    %97 = vmatprep.subr.bf16.mxu0 0
    %98 = vmatpush1.bf16.msra.mxu0 0
    %99 = vmatprep.subr.bf16.mxu0 0
    %100 = vmatpush1.bf16.msra.mxu0 0
    %101 = vmatprep.subr.bf16.mxu0 0
    %102 = vmatpush1.bf16.msra.mxu0 0
    %103 = vmatprep.subr.bf16.mxu0 0
    %104 = vmatpush1.bf16.msra.mxu0 0
    %105 = vmatprep.subr.bf16.mxu0 0
    %106 = vmatpush1.bf16.msra.mxu0 0
    %107 = vmatprep.subr.bf16.mxu0 0
    %108 = vmatpush1.bf16.msra.mxu0 0
    %109 = vmatprep.subr.bf16.mxu0 0
    %110 = vmatpush1.bf16.msra.mxu0 0
    %111 = vmatprep.subr.bf16.mxu0 0
    %112 = vmatpush1.bf16.msra.mxu0 0
    %113 = vmatprep.subr.bf16.mxu0 0
    %114 = vmatpush1.bf16.msra.mxu0 0
    %115 = vmatprep.mubr.bf16.mxu0 0
    %116 = vmatmul.mubr.bf16.gmra.mrb[0].mxu0 %v77
    %v117 = vpop.f32.mrb[0].mxu0
    %v118 = vadd.f32 %v64, %v117
    %v119 = vpop.f32.mrb[0].mxu0
    %v120 = vpop.f32.mrb[0].mxu0
    %v121 = vadd.f32 %v64, %v120
    %v122 = vpop.f32.mrb[0].mxu0
    %123 = vdwg.mxu0
    %v124 = vmax.f32 %v118, 0.0
    %v125 = vmax.f32 %v121, 0.0
    %v126 = vpack.c.bf16 %v125, %v124
    %v127 = vld [vmem:[%s3] sm:$0xff]
    %v128 = vld [vmem:[%s3 + $0x8] sm:$0xff]
    %v129 = vld [vmem:[%s3 + $0x10] sm:$0xff]
    %v130 = vld [vmem:[%s3 + $0x18] sm:$0xff]
    %v131 = vld [vmem:[%s3 + $0x20] sm:$0xff]
    %v132 = vld [vmem:[%s3 + $0x28] sm:$0xff]
    %v133 = vld [vmem:[%s3 + $0x30] sm:$0xff]
    %v134 = vld [vmem:[%s3 + $0x38] sm:$0xff]
    %v135 = vld [vmem:[%s4] sm:$0x3]
    %v137 = vlaneseq
    %v138 = vshrl.u32 %v137, 7
    %v139 = vsub.s32 0, %v138
    %v140 = vrot.slane %v135, %v139
    %v141 = vlaneseq
    %v142 = vshrl.u32 %v141, 7
    %v143 = vsub.s32 1, %v142
    %v144 = vrot.slane %v135, %v143
    %v155 = vunpack.c.l.b16 %v127
    %v156 = vunpack.c.h.b16 %v127
    %v157 = vunpack.c.l.b16 %v128
    %v158 = vunpack.c.h.b16 %v128
    %v159 = vunpack.c.l.b16 %v129
    %v160 = vunpack.c.h.b16 %v129
    %v161 = vunpack.c.l.b16 %v130
    %v162 = vunpack.c.h.b16 %v130
    %v163 = vunpack.c.l.b16 %v131
    %v164 = vunpack.c.h.b16 %v131
    %v165 = vunpack.c.l.b16 %v132
    %v166 = vunpack.c.h.b16 %v132
    %v167 = vunpack.c.l.b16 %v133
    %v168 = vunpack.c.h.b16 %v133
    %v169 = vunpack.c.l.b16 %v134
    %v170 = vunpack.c.h.b16 %v134
    %v171 = vpack.c.b16 %v157, %v155
    %v172 = vpack.c.b16 %v158, %v156
    %v173 = vpack.c.b16 %v161, %v159
    %v174 = vpack.c.b16 %v162, %v160
    %v175 = vpack.c.b16 %v165, %v163
    %v176 = vpack.c.b16 %v166, %v164
    %v177 = vpack.c.b16 %v169, %v167
    %v178 = vpack.c.b16 %v170, %v168
    %vm187 = vcmask 523264
    %v189 = vsel %vm187, %v126, 0
    %191 = vmatprep.subr.bf16.mxu0 %v172
    %192 = vmatpush1.bf16.msra.mxu0 %v171
    %193 = vmatprep.subr.bf16.mxu0 %v174
    %194 = vmatpush1.bf16.msra.mxu0 %v173
    %195 = vmatprep.subr.bf16.mxu0 %v176
    %196 = vmatpush1.bf16.msra.mxu0 %v175
    %197 = vmatprep.subr.bf16.mxu0 %v178
    %198 = vmatpush1.bf16.msra.mxu0 %v177
    %199 = vmatprep.subr.bf16.mxu0 0
    %200 = vmatpush1.bf16.msra.mxu0 0
    %201 = vmatprep.subr.bf16.mxu0 0
    %202 = vmatpush1.bf16.msra.mxu0 0
    %203 = vmatprep.subr.bf16.mxu0 0
    %204 = vmatpush1.bf16.msra.mxu0 0
    %205 = vmatprep.subr.bf16.mxu0 0
    %206 = vmatpush1.bf16.msra.mxu0 0
    %207 = vmatprep.subr.bf16.mxu0 0
    %208 = vmatpush1.bf16.msra.mxu0 0
    %209 = vmatprep.subr.bf16.mxu0 0
    %210 = vmatpush1.bf16.msra.mxu0 0
    %211 = vmatprep.subr.bf16.mxu0 0
    %212 = vmatpush1.bf16.msra.mxu0 0
    %213 = vmatprep.subr.bf16.mxu0 0
    %214 = vmatpush1.bf16.msra.mxu0 0
    %215 = vmatprep.subr.bf16.mxu0 0
    %216 = vmatpush1.bf16.msra.mxu0 0
    %217 = vmatprep.subr.bf16.mxu0 0
    %218 = vmatpush1.bf16.msra.mxu0 0
    %219 = vmatprep.subr.bf16.mxu0 0
    %220 = vmatpush1.bf16.msra.mxu0 0
    %221 = vmatprep.subr.bf16.mxu0 0
    %222 = vmatpush1.bf16.msra.mxu0 0
    %223 = vmatprep.mubr.bf16.mxu0 0
    %224 = vmatmul.mubr.bf16.gmra.mrb[0].mxu0 %v189
    %v225 = vpop.f32.mrb[0].mxu0
    %v226 = vadd.f32 %v140, %v225
    %v227 = vpop.f32.mrb[0].mxu0
    %v228 = vadd.f32 %v144, %v227
    %v229 = vpop.f32.mrb[0].mxu0
    %v230 = vadd.f32 %v140, %v229
    %v231 = vpop.f32.mrb[0].mxu0
    %v232 = vadd.f32 %v144, %v231
    %233 = vdwg.mxu0
    %v234 = vmax.f32 %v226, 0.0
    %v235 = vmax.f32 %v228, 0.0
    %v236 = vmax.f32 %v230, 0.0
    %v237 = vmax.f32 %v232, 0.0
    %v238 = vpack.c.bf16 %v236, %v234
    %v239 = vpack.c.bf16 %v237, %v235
    %v240 = vld [vmem:[#allocation2] sm:$0xff]
    %v241 = vld [vmem:[#allocation2 + $0x8] sm:$0xff]
    %v242 = vld [vmem:[#allocation2 + $0x10] sm:$0xff]
    %v243 = vld [vmem:[#allocation2 + $0x18] sm:$0xff]
    %v244 = vld [vmem:[#allocation2 + $0x20] sm:$0xff]
    %v245 = vld [vmem:[#allocation2 + $0x28] sm:$0xff]
    %v246 = vld [vmem:[#allocation2 + $0x30] sm:$0xff]
    %v247 = vld [vmem:[#allocation2 + $0x38] sm:$0xff]
    %v248 = vld [vmem:[#allocation2 + $0x40] sm:$0xff]
    %v249 = vld [vmem:[#allocation2 + $0x48] sm:$0xff]
    %v250 = vld [vmem:[#allocation2 + $0x50] sm:$0xff]
    %v251 = vld [vmem:[#allocation2 + $0x58] sm:$0xff]
    %v252 = vld [vmem:[#allocation2 + $0x60] sm:$0xff]
    %v253 = vld [vmem:[#allocation2 + $0x68] sm:$0xff]
    %v254 = vld [vmem:[#allocation2 + $0x70] sm:$0xff]
    %v255 = vld [vmem:[#allocation2 + $0x78] sm:$0xff]
    %v256 = vld [vmem:[#allocation2 + $0x80] sm:$0xff]
    %v257 = vld [vmem:[#allocation2 + $0x88] sm:$0xff]
    %v258 = vld [vmem:[#allocation2 + $0x90] sm:$0xff]
    %v259 = vld [vmem:[#allocation2 + $0x98] sm:$0xff]
    %v260 = vld [vmem:[#allocation2 + $0xa0] sm:$0xff]
    %v261 = vld [vmem:[#allocation2 + $0xa8] sm:$0xff]
    %v262 = vld [vmem:[#allocation2 + $0xb0] sm:$0xff]
    %v263 = vld [vmem:[#allocation2 + $0xb8] sm:$0xff]
    %v264 = vld [vmem:[#allocation2 + $0xc0] sm:$0xff]
    %v265 = vld [vmem:[#allocation2 + $0xc8] sm:$0xff]
    %v266 = vld [vmem:[#allocation2 + $0xd0] sm:$0xff]
    %v267 = vld [vmem:[#allocation2 + $0xd8] sm:$0xff]
    %v268 = vld [vmem:[#allocation2 + $0xe0] sm:$0xff]
    %v269 = vld [vmem:[#allocation2 + $0xe8] sm:$0xff]
    %v270 = vld [vmem:[#allocation2 + $0xf0] sm:$0xff]
    %v271 = vld [vmem:[#allocation2 + $0xf8] sm:$0xff]
    %v272 = vld [vmem:[%s6] sm:$0x3]
    %v274 = vlaneseq
    %v275 = vshrl.u32 %v274, 7
    %v276 = vsub.s32 0, %v275
    %v277 = vrot.slane %v272, %v276
    %v278 = vlaneseq
    %v279 = vshrl.u32 %v278, 7
    %v280 = vsub.s32 1, %v279
    %v281 = vrot.slane %v272, %v280
    %v316 = vunpack.c.l.b16 %v240
    %v317 = vunpack.c.h.b16 %v240
    %v318 = vunpack.c.l.b16 %v241
    %v319 = vunpack.c.h.b16 %v241
    %v320 = vunpack.c.l.b16 %v242
    %v321 = vunpack.c.h.b16 %v242
    %v322 = vunpack.c.l.b16 %v243
    %v323 = vunpack.c.h.b16 %v243
    %v324 = vunpack.c.l.b16 %v244
    %v325 = vunpack.c.h.b16 %v244
    %v326 = vunpack.c.l.b16 %v245
    %v327 = vunpack.c.h.b16 %v245
    %v328 = vunpack.c.l.b16 %v246
    %v329 = vunpack.c.h.b16 %v246
    %v330 = vunpack.c.l.b16 %v247
    %v331 = vunpack.c.h.b16 %v247
    %v332 = vunpack.c.l.b16 %v248
    %v333 = vunpack.c.h.b16 %v248
    %v334 = vunpack.c.l.b16 %v249
    %v335 = vunpack.c.h.b16 %v249
    %v336 = vunpack.c.l.b16 %v250
    %v337 = vunpack.c.h.b16 %v250
    %v338 = vunpack.c.l.b16 %v251
    %v339 = vunpack.c.h.b16 %v251
    %v340 = vunpack.c.l.b16 %v252
    %v341 = vunpack.c.h.b16 %v252
    %v342 = vunpack.c.l.b16 %v253
    %v343 = vunpack.c.h.b16 %v253
    %v344 = vunpack.c.l.b16 %v254
    %v345 = vunpack.c.h.b16 %v254
    %v346 = vunpack.c.l.b16 %v255
    %v347 = vunpack.c.h.b16 %v255
    %v348 = vunpack.c.l.b16 %v256
    %v349 = vunpack.c.h.b16 %v256
    %v350 = vunpack.c.l.b16 %v257
    %v351 = vunpack.c.h.b16 %v257
    %v352 = vunpack.c.l.b16 %v258
    %v353 = vunpack.c.h.b16 %v258
    %v354 = vunpack.c.l.b16 %v259
    %v355 = vunpack.c.h.b16 %v259
    %v356 = vunpack.c.l.b16 %v260
    %v357 = vunpack.c.h.b16 %v260
    %v358 = vunpack.c.l.b16 %v261
    %v359 = vunpack.c.h.b16 %v261
    %v360 = vunpack.c.l.b16 %v262
    %v361 = vunpack.c.h.b16 %v262
    %v362 = vunpack.c.l.b16 %v263
    %v363 = vunpack.c.h.b16 %v263
    %v364 = vunpack.c.l.b16 %v264
    %v365 = vunpack.c.h.b16 %v264
    %v366 = vunpack.c.l.b16 %v265
    %v367 = vunpack.c.h.b16 %v265
    %v368 = vunpack.c.l.b16 %v266
    %v369 = vunpack.c.h.b16 %v266
    %v370 = vunpack.c.l.b16 %v267
    %v371 = vunpack.c.h.b16 %v267
    %v372 = vunpack.c.l.b16 %v268
    %v373 = vunpack.c.h.b16 %v268
    %v374 = vunpack.c.l.b16 %v269
    %v375 = vunpack.c.h.b16 %v269
    %v376 = vunpack.c.l.b16 %v270
    %v377 = vunpack.c.h.b16 %v270
    %v378 = vunpack.c.l.b16 %v271
    %v379 = vunpack.c.h.b16 %v271
    %v380 = vpack.c.b16 %v318, %v316
    %v381 = vpack.c.b16 %v319, %v317
    %v382 = vpack.c.b16 %v322, %v320
    %v383 = vpack.c.b16 %v323, %v321
    %v384 = vpack.c.b16 %v326, %v324
    %v385 = vpack.c.b16 %v327, %v325
    %v386 = vpack.c.b16 %v330, %v328
    %v387 = vpack.c.b16 %v331, %v329
    %v388 = vpack.c.b16 %v334, %v332
    %v389 = vpack.c.b16 %v335, %v333
    %v390 = vpack.c.b16 %v338, %v336
    %v391 = vpack.c.b16 %v339, %v337
    %v392 = vpack.c.b16 %v342, %v340
    %v393 = vpack.c.b16 %v343, %v341
    %v394 = vpack.c.b16 %v346, %v344
    %v395 = vpack.c.b16 %v347, %v345
    %v396 = vpack.c.b16 %v350, %v348
    %v397 = vpack.c.b16 %v351, %v349
    %v398 = vpack.c.b16 %v354, %v352
    %v399 = vpack.c.b16 %v355, %v353
    %v400 = vpack.c.b16 %v358, %v356
    %v401 = vpack.c.b16 %v359, %v357
    %v402 = vpack.c.b16 %v362, %v360
    %v403 = vpack.c.b16 %v363, %v361
    %v404 = vpack.c.b16 %v366, %v364
    %v405 = vpack.c.b16 %v367, %v365
    %v406 = vpack.c.b16 %v370, %v368
    %v407 = vpack.c.b16 %v371, %v369
    %v408 = vpack.c.b16 %v374, %v372
    %v409 = vpack.c.b16 %v375, %v373
    %v410 = vpack.c.b16 %v378, %v376
    %v411 = vpack.c.b16 %v379, %v377
    %444 = vmatprep.subr.bf16.mxu0 %v381
    %445 = vmatpush1.bf16.msra.mxu0 %v380
    %446 = vmatprep.subr.bf16.mxu0 %v383
    %447 = vmatpush1.bf16.msra.mxu0 %v382
    %448 = vmatprep.subr.bf16.mxu0 %v385
    %449 = vmatpush1.bf16.msra.mxu0 %v384
    %450 = vmatprep.subr.bf16.mxu0 %v387
    %451 = vmatpush1.bf16.msra.mxu0 %v386
    %452 = vmatprep.subr.bf16.mxu0 %v389
    %453 = vmatpush1.bf16.msra.mxu0 %v388
    %454 = vmatprep.subr.bf16.mxu0 %v391
    %455 = vmatpush1.bf16.msra.mxu0 %v390
    %456 = vmatprep.subr.bf16.mxu0 %v393
    %457 = vmatpush1.bf16.msra.mxu0 %v392
    %458 = vmatprep.subr.bf16.mxu0 %v395
    %459 = vmatpush1.bf16.msra.mxu0 %v394
    %460 = vmatprep.subr.bf16.mxu0 %v397
    %461 = vmatpush1.bf16.msra.mxu0 %v396
    %462 = vmatprep.subr.bf16.mxu0 %v399
    %463 = vmatpush1.bf16.msra.mxu0 %v398
    %464 = vmatprep.subr.bf16.mxu0 %v401
    %465 = vmatpush1.bf16.msra.mxu0 %v400
    %466 = vmatprep.subr.bf16.mxu0 %v403
    %467 = vmatpush1.bf16.msra.mxu0 %v402
    %468 = vmatprep.subr.bf16.mxu0 %v405
    %469 = vmatpush1.bf16.msra.mxu0 %v404
    %470 = vmatprep.subr.bf16.mxu0 %v407
    %471 = vmatpush1.bf16.msra.mxu0 %v406
    %472 = vmatprep.subr.bf16.mxu0 %v409
    %473 = vmatpush1.bf16.msra.mxu0 %v408
    %474 = vmatprep.subr.bf16.mxu0 %v411
    %475 = vmatpush1.bf16.msra.mxu0 %v410
    %476 = vmatprep.mubr.bf16.mxu0 %v239
    %477 = vmatmul.mubr.bf16.gmra.mrb[0].mxu0 %v238
    %v478 = vpop.f32.mrb[0].mxu0
    %v479 = vadd.f32 %v277, %v478
    %v480 = vpop.f32.mrb[0].mxu0
    %v481 = vadd.f32 %v281, %v480
    %v482 = vpop.f32.mrb[0].mxu0
    %v483 = vadd.f32 %v277, %v482
    %v484 = vpop.f32.mrb[0].mxu0
    %v485 = vadd.f32 %v281, %v484
    %486 = vdwg.mxu0
    %v487 = vmax.f32 %v479, 0.0
    %v488 = vmax.f32 %v481, 0.0
    %v489 = vmax.f32 %v483, 0.0
    %v490 = vmax.f32 %v485, 0.0
    %v491 = vpack.c.bf16 %v489, %v487
    %v492 = vpack.c.bf16 %v490, %v488
    %v493 = vld [vmem:[%s7] sm:$0xf]
    %v494 = vld [vmem:[%s7 + $0x4] sm:$0xf]
    %v495 = vld [vmem:[%s7 + $0x8] sm:$0xf]
    %v496 = vld [vmem:[%s7 + $0xc] sm:$0xf]
    %v497 = vld [vmem:[%s7 + $0x10] sm:$0xf]
    %v498 = vld [vmem:[%s7 + $0x14] sm:$0xf]
    %v499 = vld [vmem:[%s7 + $0x18] sm:$0xf]
    %v500 = vld [vmem:[%s7 + $0x1c] sm:$0xf]
    %v501 = vld [vmem:[%s7 + $0x20] sm:$0xf]
    %v502 = vld [vmem:[%s7 + $0x24] sm:$0xf]
    %v503 = vld [vmem:[%s7 + $0x28] sm:$0xf]
    %v504 = vld [vmem:[%s7 + $0x2c] sm:$0xf]
    %v505 = vld [vmem:[%s7 + $0x30] sm:$0xf]
    %v506 = vld [vmem:[%s7 + $0x34] sm:$0xf]
    %v507 = vld [vmem:[%s7 + $0x38] sm:$0xf]
    %v508 = vld [vmem:[%s7 + $0x3c] sm:$0xf]
    %v509 = vld [vmem:[%s7 + $0x40] sm:$0xf]
    %v510 = vld [vmem:[%s7 + $0x44] sm:$0xf]
    %v511 = vld [vmem:[%s7 + $0x48] sm:$0xf]
    %v512 = vld [vmem:[%s7 + $0x4c] sm:$0xf]
    %v513 = vld [vmem:[%s7 + $0x50] sm:$0xf]
    %v514 = vld [vmem:[%s7 + $0x54] sm:$0xf]
    %v515 = vld [vmem:[%s7 + $0x58] sm:$0xf]
    %v516 = vld [vmem:[%s7 + $0x5c] sm:$0xf]
    %v517 = vld [vmem:[%s7 + $0x60] sm:$0xf]
    %v518 = vld [vmem:[%s7 + $0x64] sm:$0xf]
    %v519 = vld [vmem:[%s7 + $0x68] sm:$0xf]
    %v520 = vld [vmem:[%s7 + $0x6c] sm:$0xf]
    %v521 = vld [vmem:[%s7 + $0x70] sm:$0xf]
    %v522 = vld [vmem:[%s7 + $0x74] sm:$0xf]
    %v523 = vld [vmem:[%s7 + $0x78] sm:$0xf]
    %v524 = vld [vmem:[%s7 + $0x7c] sm:$0xf]
    %v525 = vld [vmem:[%s8] sm:$0x1]
    %v527 = vlaneseq
    %v528 = vshrl.u32 %v527, 7
    %v529 = vsub.s32 0, %v528
    %v530 = vrot.slane %v525, %v529
    %v564 = vunpack.c.l.b16 %v493
    %v565 = vunpack.c.l.b16 %v494
    %v566 = vunpack.c.l.b16 %v495
    %v567 = vunpack.c.l.b16 %v496
    %v568 = vunpack.c.l.b16 %v497
    %v569 = vunpack.c.l.b16 %v498
    %v570 = vunpack.c.l.b16 %v499
    %v571 = vunpack.c.l.b16 %v500
    %v572 = vunpack.c.l.b16 %v501
    %v573 = vunpack.c.l.b16 %v502
    %v574 = vunpack.c.l.b16 %v503
    %v575 = vunpack.c.l.b16 %v504
    %v576 = vunpack.c.l.b16 %v505
    %v577 = vunpack.c.l.b16 %v506
    %v578 = vunpack.c.l.b16 %v507
    %v579 = vunpack.c.l.b16 %v508
    %v580 = vunpack.c.l.b16 %v509
    %v581 = vunpack.c.l.b16 %v510
    %v582 = vunpack.c.l.b16 %v511
    %v583 = vunpack.c.l.b16 %v512
    %v584 = vunpack.c.l.b16 %v513
    %v585 = vunpack.c.l.b16 %v514
    %v586 = vunpack.c.l.b16 %v515
    %v587 = vunpack.c.l.b16 %v516
    %v588 = vunpack.c.l.b16 %v517
    %v589 = vunpack.c.l.b16 %v518
    %v590 = vunpack.c.l.b16 %v519
    %v591 = vunpack.c.l.b16 %v520
    %v592 = vunpack.c.l.b16 %v521
    %v593 = vunpack.c.l.b16 %v522
    %v594 = vunpack.c.l.b16 %v523
    %v595 = vunpack.c.l.b16 %v524
    %v596 = vpack.c.b16 %v565, %v564
    %v597 = vpack.c.b16 %v567, %v566
    %v598 = vpack.c.b16 %v569, %v568
    %v599 = vpack.c.b16 %v571, %v570
    %v600 = vpack.c.b16 %v573, %v572
    %v601 = vpack.c.b16 %v575, %v574
    %v602 = vpack.c.b16 %v577, %v576
    %v603 = vpack.c.b16 %v579, %v578
    %v604 = vpack.c.b16 %v581, %v580
    %v605 = vpack.c.b16 %v583, %v582
    %v606 = vpack.c.b16 %v585, %v584
    %v607 = vpack.c.b16 %v587, %v586
    %v608 = vpack.c.b16 %v589, %v588
    %v609 = vpack.c.b16 %v591, %v590
    %v610 = vpack.c.b16 %v593, %v592
    %v611 = vpack.c.b16 %v595, %v594
    %628 = vmatprep.subr.bf16.mxu0 0
    %629 = vmatpush1.bf16.msra.mxu0 %v596
    %630 = vmatprep.subr.bf16.mxu0 0
    %631 = vmatpush1.bf16.msra.mxu0 %v597
    %632 = vmatprep.subr.bf16.mxu0 0
    %633 = vmatpush1.bf16.msra.mxu0 %v598
    %634 = vmatprep.subr.bf16.mxu0 0
    %635 = vmatpush1.bf16.msra.mxu0 %v599
    %636 = vmatprep.subr.bf16.mxu0 0
    %637 = vmatpush1.bf16.msra.mxu0 %v600
    %638 = vmatprep.subr.bf16.mxu0 0
    %639 = vmatpush1.bf16.msra.mxu0 %v601
    %640 = vmatprep.subr.bf16.mxu0 0
    %641 = vmatpush1.bf16.msra.mxu0 %v602
    %642 = vmatprep.subr.bf16.mxu0 0
    %643 = vmatpush1.bf16.msra.mxu0 %v603
    %644 = vmatprep.subr.bf16.mxu0 0
    %645 = vmatpush1.bf16.msra.mxu0 %v604
    %646 = vmatprep.subr.bf16.mxu0 0
    %647 = vmatpush1.bf16.msra.mxu0 %v605
    %648 = vmatprep.subr.bf16.mxu0 0
    %649 = vmatpush1.bf16.msra.mxu0 %v606
    %650 = vmatprep.subr.bf16.mxu0 0
    %651 = vmatpush1.bf16.msra.mxu0 %v607
    %652 = vmatprep.subr.bf16.mxu0 0
    %653 = vmatpush1.bf16.msra.mxu0 %v608
    %654 = vmatprep.subr.bf16.mxu0 0
    %655 = vmatpush1.bf16.msra.mxu0 %v609
    %656 = vmatprep.subr.bf16.mxu0 0
    %657 = vmatpush1.bf16.msra.mxu0 %v610
    %658 = vmatprep.subr.bf16.mxu0 0
    %659 = vmatpush1.bf16.msra.mxu0 %v611
    %660 = vmatprep.mubr.bf16.mxu0 %v492
    %661 = vmatmul.mubr.bf16.gmra.mrb[0].mxu0 %v491
    %v662 = vpop.f32.mrb[0].mxu0
    %v663 = vadd.f32 %v530, %v662
    %v664 = vpop.f32.mrb[0].mxu0
    %v665 = vpop.f32.mrb[0].mxu0
    %v666 = vadd.f32 %v530, %v665
    %v667 = vpop.f32.mrb[0].mxu0
    %668 = vdwg.mxu0
    %v669 = vmax.f32 %v663, 0.0
    %v670 = vmax.f32 %v666, 0.0
    %v671 = vpack.c.bf16 %v670, %v669
    %v672 = vld [vmem:[%s9] sm:$0xf]
    %v673 = vld [vmem:[%s9 + $0x4] sm:$0xf]
    %v674 = vld [vmem:[%s9 + $0x8] sm:$0xf]
    %v675 = vld [vmem:[%s9 + $0xc] sm:$0xf]
    %v676 = vld [vmem:[%s9 + $0x10] sm:$0xf]
    %v677 = vld [vmem:[%s9 + $0x14] sm:$0xf]
    %v678 = vld [vmem:[%s9 + $0x18] sm:$0xf]
    %v679 = vld [vmem:[%s9 + $0x1c] sm:$0xf]
    %v680 = vld [vmem:[%s10] sm:$0x1]
    %v682 = vlaneseq
    %v683 = vshrl.u32 %v682, 7
    %v684 = vsub.s32 0, %v683
    %v685 = vrot.slane %v680, %v684
    %v695 = vunpack.c.l.b16 %v672
    %v696 = vunpack.c.l.b16 %v673
    %v697 = vunpack.c.l.b16 %v674
    %v698 = vunpack.c.l.b16 %v675
    %v699 = vunpack.c.l.b16 %v676
    %v700 = vunpack.c.l.b16 %v677
    %v701 = vunpack.c.l.b16 %v678
    %v702 = vunpack.c.l.b16 %v679
    %v703 = vpack.c.b16 %v696, %v695
    %v704 = vpack.c.b16 %v698, %v697
    %v705 = vpack.c.b16 %v700, %v699
    %v706 = vpack.c.b16 %v702, %v701
    %v712 = vsel %vm187, %v671, 0
    %714 = vmatprep.subr.bf16.mxu0 0
    %715 = vmatpush1.bf16.msra.mxu0 %v703
    %716 = vmatprep.subr.bf16.mxu0 0
    %717 = vmatpush1.bf16.msra.mxu0 %v704
    %718 = vmatprep.subr.bf16.mxu0 0
    %719 = vmatpush1.bf16.msra.mxu0 %v705
    %720 = vmatprep.subr.bf16.mxu0 0
    %721 = vmatpush1.bf16.msra.mxu0 %v706
    %722 = vmatprep.subr.bf16.mxu0 0
    %723 = vmatpush1.bf16.msra.mxu0 0
    %724 = vmatprep.subr.bf16.mxu0 0
    %725 = vmatpush1.bf16.msra.mxu0 0
    %726 = vmatprep.subr.bf16.mxu0 0
    %727 = vmatpush1.bf16.msra.mxu0 0
    %728 = vmatprep.subr.bf16.mxu0 0
    %729 = vmatpush1.bf16.msra.mxu0 0
    %730 = vmatprep.subr.bf16.mxu0 0
    %731 = vmatpush1.bf16.msra.mxu0 0
    %732 = vmatprep.subr.bf16.mxu0 0
    %733 = vmatpush1.bf16.msra.mxu0 0
    %734 = vmatprep.subr.bf16.mxu0 0
    %735 = vmatpush1.bf16.msra.mxu0 0
    %736 = vmatprep.subr.bf16.mxu0 0
    %737 = vmatpush1.bf16.msra.mxu0 0
    %738 = vmatprep.subr.bf16.mxu0 0
    %739 = vmatpush1.bf16.msra.mxu0 0
    %740 = vmatprep.subr.bf16.mxu0 0
    %741 = vmatpush1.bf16.msra.mxu0 0
    %742 = vmatprep.subr.bf16.mxu0 0
    %743 = vmatpush1.bf16.msra.mxu0 0
    %744 = vmatprep.subr.bf16.mxu0 0
    %745 = vmatpush1.bf16.msra.mxu0 0
    %746 = vmatprep.mubr.bf16.mxu0 0
    %747 = vmatmul.mubr.bf16.gmra.mrb[0].mxu0 %v712
    %v748 = vpop.f32.mrb[0].mxu0
    %v749 = vadd.f32 %v685, %v748
    %v750 = vpop.f32.mrb[0].mxu0
    %v751 = vpop.f32.mrb[0].mxu0
    %v752 = vadd.f32 %v685, %v751
    %v753 = vpop.f32.mrb[0].mxu0
    %754 = vdwg.mxu0
    %v755 = vpack.c.bf16 %v752, %v749
    %v757 = vunpack.c.l.b16 %v755
    %v758 = vunpack.c.h.b16 %v755
    %v759 = vpack.c.b16 %v757, %v757
    %v760 = vpack.c.b16 %v758, %v758
    %763 = vst [vmem:[%s11] sm:$0xf] %v759
    %764 = vst [vmem:[%s11 + $0x4] sm:$0xf] %v760
    // Predicated region
    $region50: #{mlp_forward.1} parent=1 // pred_check
      _
    $region51: #{mlp_forward.1} parent=1 // pred_check_branch
      %766 = sbr.rel (0) target = $region53
    $region52: #{mlp_forward.1} parent=1 // pred_region
      _
    $region53: #{mlp_forward.1} parent=1 // pred_fallthru
      _
    // Predicated region
    $region54: #{mlp_forward.1} parent=1 // pred_check
      _
    $region55: #{mlp_forward.1} parent=1 // pred_check_branch
      %768 = sbr.rel (0) target = $region57
    $region56: #{mlp_forward.1} parent=1 // pred_region
      _
    $region57: #{mlp_forward.1} parent=1 // pred_fallthru
      _
    %769 = vsyncpa [#allocation3], 1

</llo_original>
